<compile_context>
chip_gen: v7x
topology: tpu7x:2x2x1
jax: 0.10.0
libtpu: 0.0.40
codegen_flags: <defaults>
</compile_context>

<pallas_src>
import jax
import jax.numpy as jnp
from jax.experimental import pallas as pl
from jax.experimental.pallas import tpu as pltpu

INPUT_DIM = 1
OUTPUT_DIM = 1
LANE = 128
SUBLANE = 8


def _linear_kernel(w_ref, b_ref, x_ref, o_ref):
    # w_ref, b_ref: (1, 1) scalars in SMEM.
    # x_ref, o_ref: (block_rows, 128) f32 tiles in VMEM.
    # Pure VPU multiply-add; the scalars broadcast over the lane-dense tile.
    o_ref[...] = x_ref[...] * w_ref[0, 0] + b_ref[0, 0]


def linear_regression_forward(x, weight, bias, *, block_rows=8192):
    """x: (B, 1), weight: (1, 1), bias: (1,) -> (B, 1), same dtype as x."""
    batch, in_features = x.shape
    out_features, w_in = weight.shape
    assert in_features == INPUT_DIM and w_in == INPUT_DIM
    assert out_features == OUTPUT_DIM

    n = batch
    w2d = weight.reshape(1, 1).astype(x.dtype)
    b2d = bias.reshape(1, 1).astype(x.dtype)

    # --- lane-dense layout: view the (B, 1) column as a (rows, 128) slab ---
    rows = pl.cdiv(n, LANE)
    padded_n = rows * LANE
    if padded_n == n:
        # Zero-copy fast path: no pad, no output slice.
        x2d = x.reshape(rows, LANE)
    else:
        # Pad only to the next multiple of 128 (independent of block_rows).
        x2d = jnp.pad(x.reshape(-1), (0, padded_n - n)).reshape(rows, LANE)

    # --- block sizing ---
    # Big enough to amortize per-step pipeline overhead; >= 2 grid steps when
    # there is enough data (v7x megacore); multiple of 8 whenever the block
    # does not cover the full row dimension (sublane tiling constraint).
    if rows >= 2 * SUBLANE:
        br = min(max(int(block_rows), 1), pl.cdiv(rows, 2))
        br = max(SUBLANE, (br // SUBLANE) * SUBLANE)
    else:
        br = rows  # single block equal to the full array (always legal)

    grid = (pl.cdiv(rows, br),)

    out2d = pl.pallas_call(
        _linear_kernel,
        out_shape=jax.ShapeDtypeStruct((rows, LANE), x.dtype),
        grid=grid,
        in_specs=[
            pl.BlockSpec((1, 1), lambda i: (0, 0),
                         memory_space=pltpu.MemorySpace.SMEM),
            pl.BlockSpec((1, 1), lambda i: (0, 0),
                         memory_space=pltpu.MemorySpace.SMEM),
            pl.BlockSpec((br, LANE), lambda i: (i, 0)),
        ],
        out_specs=pl.BlockSpec((br, LANE), lambda i: (i, 0)),
        compiler_params=pltpu.CompilerParams(
            dimension_semantics=("parallel",),
            vmem_limit_bytes=32 * 1024 * 1024,
        ),
        cost_estimate=pl.CostEstimate(
            flops=2 * n, transcendentals=0, bytes_accessed=8 * padded_n),
    )(w2d, b2d, x2d)

    if padded_n == n:
        return out2d.reshape(batch, out_features)
    # Padded path: drop the padded lanes, restore (B, 1).
    return out2d.reshape(-1)[:n].reshape(batch, out_features)


if __name__ == "__main__":
    key = jax.random.PRNGKey(0)
    kx1, kx2, kx3, kw, kb = jax.random.split(key, 5)

    # Parameters matching nn.Linear(1, 1): W (1, 1), b (1,)
    weight = jax.random.normal(kw, (OUTPUT_DIM, INPUT_DIM), dtype=jnp.float32)
    bias = jax.random.normal(kb, (OUTPUT_DIM,), dtype=jnp.float32)

    def check(x, **kwargs):
        out = jax.block_until_ready(
            linear_regression_forward(x, weight, bias, **kwargs))
        ref = x @ weight.T + bias
        assert out.shape == ref.shape
        assert jnp.allclose(out, ref, atol=1e-5, rtol=1e-5)

    # Case 1: toy batch like the original script's [[0.],[1.],...] data
    # (unaligned, single full-array block).
    check(jax.random.normal(kx1, (8, INPUT_DIM), dtype=jnp.float32))

    # Case 2: unaligned batch with the DEFAULT block size -> padded path,
    # 3-step auto-pipelined grid.
    check(jax.random.normal(kx2, (3000, INPUT_DIM), dtype=jnp.float32))

    # Case 3: 128-aligned batch -> zero-copy fast path; block_rows=12 is a
    # correctness-only config exercising the multiple-of-8 rounding guard and
    # the ragged last row-block (not a performance configuration).
    check(jax.random.normal(kx3, (2944, INPUT_DIM), dtype=jnp.float32),
          block_rows=12)

    print("KERNEL_OK")
</pallas_src>

<mosaic_0001>
module attributes {stable_mosaic.version = 11 : i64} {
  func.func @_linear_kernel(%arg0: i32, %arg1: memref<1x1xf32, #tpu.memory_space<smem>>, %arg2: memref<1x1xf32, #tpu.memory_space<smem>>, %arg3: memref<1x128xf32, #tpu.memory_space<vmem>>, %arg4: memref<1x128xf32, #tpu.memory_space<vmem>>) attributes {dimension_semantics = [#tpu.dimension_semantics<parallel>], iteration_bounds = array<i64: 1>, scalar_prefetch = 0 : i64, scratch_operands = 0 : i64, tpu.core_type = #tpu.core_type<tc>, window_params = [{transform_indices = @transform_0, window_bounds = array<i64: 1, 1>}, {transform_indices = @transform_1, window_bounds = array<i64: 1, 1>}, {transform_indices = @transform_2, window_bounds = array<i64: 1, 128>}, {transform_indices = @transform_3, window_bounds = array<i64: 1, 128>}]} {
    %c0 = arith.constant 0 : index
    %c0_0 = arith.constant 0 : index
    %0 = vector.load %arg3[%c0, %c0_0] : memref<1x128xf32, #tpu.memory_space<vmem>>, vector<1x128xf32>
    %c0_1 = arith.constant 0 : index
    %c0_2 = arith.constant 0 : index
    %1 = memref.load %arg1[%c0_1, %c0_2] : memref<1x1xf32, #tpu.memory_space<smem>>
    %2 = vector.broadcast %1 : f32 to vector<1x128xf32>
    %3 = arith.mulf %0, %2 : vector<1x128xf32>
    %c0_3 = arith.constant 0 : index
    %c0_4 = arith.constant 0 : index
    %4 = memref.load %arg2[%c0_3, %c0_4] : memref<1x1xf32, #tpu.memory_space<smem>>
    %5 = vector.broadcast %4 : f32 to vector<1x128xf32>
    %6 = arith.addf %3, %5 : vector<1x128xf32>
    %c0_5 = arith.constant 0 : index
    %c0_6 = arith.constant 0 : index
    %7 = vector.load %arg4[%c0_5, %c0_6] : memref<1x128xf32, #tpu.memory_space<vmem>>, vector<1x128xf32>
    tpu.vector_store %arg4[%c0_5, %c0_6], %6 {strides = array<i32>} : memref<1x128xf32, #tpu.memory_space<vmem>>, vector<1x128xf32>,
    return
  }
  func.func @transform_0(%arg0: i32) -> (i32, i32) {
    %c0_i32 = arith.constant 0 : i32
    %c0_i32_0 = arith.constant 0 : i32
    %c0_i32_1 = arith.constant 0 : i32
    return %c0_i32, %c0_i32_0 : i32, i32
  }
  func.func @transform_1(%arg0: i32) -> (i32, i32) {
    %c0_i32 = arith.constant 0 : i32
    %c0_i32_0 = arith.constant 0 : i32
    %c0_i32_1 = arith.constant 0 : i32
    return %c0_i32, %c0_i32_0 : i32, i32
  }
  func.func @transform_2(%arg0: i32) -> (i32, i32) {
    %c0_i32 = arith.constant 0 : i32
    %c0_i32_0 = arith.constant 0 : i32
    return %arg0, %c0_i32 : i32, i32
  }
  func.func @transform_3(%arg0: i32) -> (i32, i32) {
    %c0_i32 = arith.constant 0 : i32
    %c0_i32_0 = arith.constant 0 : i32
    return %arg0, %c0_i32 : i32, i32
  }
}

</mosaic_0001>

<llo_original>
// kernel: tpu_custom_call.1
$region0: #{tpu_custom_call.1}
  #allocation0 [shape = 'u32[]', space=smem, size = 0x4, offset = 0x4, fixed_abs, tag = 'smem constant byte address 0x4 - core index']
  #allocation1 [shape = 'u32[144,128]{1,0:T(1,128)}', space=vmem, size = 0x12000, scoped, tag = 'internal scratch']
  #allocation2 [shape = 'f32[1,1]{1,0:T(1,128)S(6)}', space=smem, size = 0x200, scoped, tag = 'scoped memory for tpu_custom_call.1']
  #allocation3 [shape = 'f32[1,1]{1,0:T(1,128)S(6)}', space=smem, size = 0x200, scoped, tag = 'scoped memory for tpu_custom_call.1']
  %s0 = inlined_call_operand.<no memory space> [shape: f32[1,1], index: 0, kind: input, shape index: {}]
  %s1 = inlined_call_operand.<no memory space> [shape: f32[1,1], index: 1, kind: input, shape index: {}]
  %s2 = inlined_call_operand.vmem [shape: f32[1,128], index: 2, kind: input, shape index: {}]
  %s3 = inlined_call_operand.hbm [shape: f32[1,128], index: 3, kind: output, shape index: {}]
  %s4 = sld [smem:[#allocation0]]
  $region22: #{tpu_custom_call.1} parent=0
    _
  %s6 = ssub.s32 1, %s4
  %s7 = scalar_select 0, %s6, %s4
  %8 = sst [smem:[#allocation2]] %s0
  %9 = sst [smem:[#allocation3]] %s1
  $region1: #{tpu_custom_call.1} parent=0
    #allocation4 [shape = 'u8[512]{0}', space=vmem, size = 0x400, scoped, tag = 'output window, operand 0, single buffered']
    #allocation5 [shape = 's32[1]{0}', space=sflag, size = 0x4, scoped, tag = 'scoped memory for tpu_custom_call.1']
    %10 = vsyncpa [#allocation5], 0
    // Predicated region
    $region2: #{tpu_custom_call.1} parent=1 // pred_check
      _
    $region3: #{tpu_custom_call.1} parent=1 // pred_check_branch
      %12 = sbr.rel (0) target = $region5
    $region4: #{tpu_custom_call.1} parent=1 // pred_region
      _
    $region5: #{tpu_custom_call.1} parent=1 // pred_fallthru
      _
    // Predicated region
    $region6: #{tpu_custom_call.1} parent=1 // pred_check
      _
    $region7: #{tpu_custom_call.1} parent=1 // pred_check_branch
      %14 = sbr.rel (0) target = $region9
    $region8: #{tpu_custom_call.1} parent=1 // pred_region
      _
    $region9: #{tpu_custom_call.1} parent=1 // pred_fallthru
      _
    // Predicated region
    $region10: #{tpu_custom_call.1} parent=1 // pred_check
      _
    $region11: #{tpu_custom_call.1} parent=1 // pred_check_branch
      %16 = sbr.rel (0) target = $region13
    $region12: #{tpu_custom_call.1} parent=1 // pred_region
      _
    $region13: #{tpu_custom_call.1} parent=1 // pred_fallthru
      _
    %v17 = vld [vmem:[%s2] sm:$0x1]
    %s18 = sld [smem:[#allocation2]]
    %v19 = vstv %s18
    %v20 = vmul.f32 %v17, %v19
    %s21 = sld [smem:[#allocation3]]
    %v22 = vstv %s21
    %v23 = vadd.f32 %v20, %v22
    %24 = vst [vmem:[#allocation4] sm:$0x1] %v23
    // Predicated region
    $region14: #{tpu_custom_call.1} parent=1 // pred_check
      _
    $region15: #{tpu_custom_call.1} parent=1 // pred_check_branch
      %26 = sbr.rel (0) target = $region17
    $region16: #{tpu_custom_call.1} parent=1 // pred_region
      %s28 = ssub.s32 16, 16
      %29 = vsyncadd [#allocation5], %s28
      %s31 = sshll.u32 [#allocation4], 4
      %s32 = int_to_ptr.vmem [resolvable:$true] %s31
      %34 = dma.vmem_to_hbm [thread:$0]  %s32, 16, %s3, [#allocation5]
    $region17: #{tpu_custom_call.1} parent=1 // pred_fallthru
      _
    // Predicated region
    $region18: #{tpu_custom_call.1} parent=1 // pred_check
      _
    $region19: #{tpu_custom_call.1} parent=1 // pred_check_branch
      %36 = sbr.rel (0) target = $region21
    $region20: #{tpu_custom_call.1} parent=1 // pred_region
      %37 = dma.done [#allocation5], 16
    $region21: #{tpu_custom_call.1} parent=1 // pred_fallthru
      _
    %38 = vsyncpa [#allocation5], 1

</llo_original>
